<compile_context>
chip_gen: v7x
topology: tpu7x:2x2x1
jax: 0.10.0
libtpu: 0.0.40
codegen_flags: <defaults>
</compile_context>

<pallas_src>
import functools

import jax
import jax.numpy as jnp
from jax.experimental import pallas as pl
from jax.experimental.pallas import tpu as pltpu


def _round_up(x, m):
    return ((x + m - 1) // m) * m


def _cdiv(a, b):
    return -(-a // b)


def _softplus_f32(z):
    # Numerically stable softplus (beta=1), matches torch.nn.functional.softplus.
    # TODO(synk): PyTorch's threshold=20 short-circuit (z>20 -> z) is not
    # replicated; difference is < 2e-9 in f32.
    return jnp.maximum(z, 0.0) + jnp.log1p(jnp.exp(-jnp.abs(z)))


def _softplusb_kernel(*refs, has_bias: bool, acc_in_out: bool):
    # Ref order: x, w, [bias], out, [acc_scratch]
    idx = 0
    x_ref = refs[idx]; idx += 1
    w_ref = refs[idx]; idx += 1
    b_ref = None
    if has_bias:
        b_ref = refs[idx]; idx += 1
    o_ref = refs[idx]; idx += 1
    acc_ref = o_ref if acc_in_out else refs[idx]

    k = pl.program_id(2)

    @pl.when(k == 0)
    def _():
        acc_ref[...] = jnp.zeros_like(acc_ref)

    # Standard (1,0) contraction on the pre-transposed [K, N] weight tile —
    # MXU matmul with f32 accumulation, no per-step XLU transpose.
    acc_ref[...] += jnp.dot(x_ref[...], w_ref[...],
                            preferred_element_type=jnp.float32)

    @pl.when(k == pl.num_programs(2) - 1)
    def _():
        z = acc_ref[...]
        if has_bias:
            z = z + b_ref[...].astype(jnp.float32)
        o_ref[...] = _softplus_f32(z).astype(o_ref.dtype)


def _vmem_capacity_bytes():
    try:
        info = pltpu.get_tpu_info()
        cap = getattr(info, "vmem_capacity_bytes", None)
        if cap:
            return int(cap)
    except Exception:
        pass
    return 64 << 20  # conservative fallback (v7x per-TensorCore VMEM)


def _pick_tiles(M, N, K, tm, tn, tk):
    cap = _vmem_capacity_bytes()
    big_vmem = cap >= (100 << 20)  # v5e / v6e (128 MiB); v7x has 64 MiB per TC
    if tm is None:
        tm = 1536 if big_vmem else 1024
    if tn is None:
        tn = 1536 if big_vmem else 1024
    if tk is None:
        tk = 1024

    # Clamp to the problem. A block dim equal to the full array dim is exempt
    # from the (8, 128) divisibility rule, so small M/N/K need no rounding.
    tm = M if M <= tm else tm
    tn = N if N <= tn else tn

    # Reduction axis: pick tk so zero-padding waste is < 128 elements per step.
    if K <= tk:
        tk, Kp = K, K
    else:
        nk = _cdiv(K, tk)
        tk = _round_up(_cdiv(K, nk), 128)
        Kp = nk * tk

    # Megacore: make sure there are >= 2 parallel (M/N) blocks when the problem
    # allows it so both TensorCores (v7x) get work.
    if _cdiv(M, tm) * _cdiv(N, tn) == 1:
        if N >= 256:
            tn = _round_up(_cdiv(N, 2), 128)
        elif M >= 64:
            tm = _round_up(_cdiv(M, 2), 32)  # 32 covers f32 / bf16 / int8 sublane packing

    return tm, tn, tk, Kp, cap


def softplusb_forward(x, weight, bias=None, *, tm=None, tn=None, tk=None,
                      mxu_dtype=None):
    """Fused softplus(linear(x, weight, bias)).

    x:      [..., in_features]
    weight: [out_features, in_features]   (PyTorch layout)
    bias:   [out_features] or None
    mxu_dtype: optional dtype for the MXU operands (e.g. jnp.bfloat16) —
               accumulation is always f32. Default: keep the input dtype.
    """
    orig_shape = x.shape
    K = orig_shape[-1]
    N, K2 = weight.shape
    assert K == K2, "in_features mismatch"

    out_dtype = x.dtype
    x2d = x.reshape(-1, K)
    M = x2d.shape[0]

    compute_dtype = jnp.dtype(mxu_dtype) if mxu_dtype is not None else jnp.dtype(x.dtype)
    op_b = compute_dtype.itemsize
    out_b = jnp.dtype(out_dtype).itemsize

    tm_, tn_, tk_, Kp, vmem_cap = _pick_tiles(M, N, K, tm, tn, tk)

    # Operands: cast in the wrapper (so HBM streaming also narrows) and
    # transpose the weight once to [K, N].
    x_c = x2d.astype(compute_dtype)
    wT = weight.T.astype(compute_dtype)
    if Kp != K:  # only the reduction axis needs zero padding
        x_c = jnp.pad(x_c, ((0, 0), (0, Kp - K)))
        wT = jnp.pad(wT, ((0, Kp - K), (0, 0)))

    grid = (_cdiv(M, tm_), _cdiv(N, tn_), Kp // tk_)

    x_spec = pl.BlockSpec((tm_, tk_), lambda i, j, k: (i, k))
    w_spec = pl.BlockSpec((tk_, tn_), lambda i, j, k: (k, j))
    o_spec = pl.BlockSpec((tm_, tn_), lambda i, j, k: (i, j))

    has_bias = bias is not None
    acc_in_out = jnp.dtype(out_dtype) == jnp.dtype(jnp.float32)
    scratch_shapes = [] if acc_in_out else [pltpu.VMEM((tm_, tn_), jnp.float32)]

    # Realistic traffic estimate: operands are re-streamed per opposite tile.
    cost = pl.CostEstimate(
        flops=2 * M * N * K,
        transcendentals=2 * M * N,  # exp + log1p per output element
        bytes_accessed=int(grid[1] * M * Kp * op_b      # x, streamed per N-tile
                           + grid[0] * N * Kp * op_b    # w, streamed per M-tile
                           + M * N * out_b
                           + (N * op_b if has_bias else 0)),
    )

    acc_bytes = 0 if acc_in_out else tm_ * tn_ * 4
    footprint = (2 * (tm_ * tk_ + tk_ * tn_) * op_b      # double-buffered operands
                 + 2 * tm_ * tn_ * out_b                 # double-buffered output
                 + acc_bytes
                 + (2 * tn_ * op_b if has_bias else 0))
    vmem_limit = int(min(max(footprint * 1.5 + (8 << 20), 32 << 20),
                         0.75 * vmem_cap))

    cparams = pltpu.CompilerParams(
        dimension_semantics=("parallel", "parallel", "arbitrary"),
        vmem_limit_bytes=vmem_limit,
    )

    kernel = functools.partial(_softplusb_kernel,
                               has_bias=has_bias, acc_in_out=acc_in_out)

    in_specs = [x_spec, w_spec]
    operands = [x_c, wT]
    if has_bias:
        in_specs.append(pl.BlockSpec((1, tn_), lambda i, j, k: (0, j)))
        operands.append(bias.reshape(1, N))

    out = pl.pallas_call(
        kernel,
        out_shape=jax.ShapeDtypeStruct((M, N), out_dtype),
        grid_spec=pltpu.PrefetchScalarGridSpec(
            num_scalar_prefetch=0,
            grid=grid,
            in_specs=in_specs,
            out_specs=o_spec,
            scratch_shapes=scratch_shapes,
        ),
        compiler_params=cparams,
        cost_estimate=cost,
    )(*operands)

    return out.reshape(orig_shape[:-1] + (N,))


if __name__ == "__main__":
    key = jax.random.PRNGKey(0)
    k_x, k_w, k_b = jax.random.split(key, 3)

    batch, seq = 4, 8
    in_features, out_features = 32, 48

    # weight init matches softplusb.reset_parameters(): U(-0.01, 0.01).
    weight = jax.random.uniform(k_w, (out_features, in_features), jnp.float32,
                                minval=-0.01, maxval=0.01)
    # small non-zero bias to exercise the bias path (module init gives zeros).
    bias = jax.random.uniform(k_b, (out_features,), jnp.float32,
                              minval=-0.05, maxval=0.05)
    x = jax.random.normal(k_x, (batch, seq, in_features), jnp.float32)

    ref = jax.nn.softplus(x @ weight.T + bias)

    # 1) exact f32 path (matches the PyTorch module semantics)
    out = jax.block_until_ready(softplusb_forward(x, weight, bias))
    assert out.shape == (batch, seq, out_features)
    assert jnp.allclose(out, ref, atol=1e-5, rtol=1e-5)

    # 2) no-bias path (accumulate-into-output kernel, no bias DMA)
    out_nb = jax.block_until_ready(softplusb_forward(x, weight, None))
    ref_nb = jax.nn.softplus(x @ weight.T)
    assert jnp.allclose(out_nb, ref_nb, atol=1e-5, rtol=1e-5)

    # 3) bf16 MXU operands, f32 accumulation (the review's fast path)
    out_bf = jax.block_until_ready(
        softplusb_forward(x, weight, bias, mxu_dtype=jnp.bfloat16))
    x_r = x.astype(jnp.bfloat16).astype(jnp.float32)
    w_r = weight.astype(jnp.bfloat16).astype(jnp.float32)
    ref_bf = jax.nn.softplus(x_r @ w_r.T + bias)
    assert jnp.allclose(out_bf, ref_bf, atol=1e-4, rtol=1e-4)
    assert jnp.allclose(out_bf, ref, atol=2e-3, rtol=2e-3)

    # 4) bf16 inputs / bf16 output (exercises the f32 scratch-accumulator path)
    xb, wb, bb = (x.astype(jnp.bfloat16), weight.astype(jnp.bfloat16),
                  bias.astype(jnp.bfloat16))
    out_b16 = jax.block_until_ready(softplusb_forward(xb, wb, bb))
    ref_b16 = jax.nn.softplus(
        xb.astype(jnp.float32) @ wb.astype(jnp.float32).T + bb.astype(jnp.float32))
    assert jnp.allclose(out_b16.astype(jnp.float32), ref_b16, atol=2e-2, rtol=2e-2)

    print("KERNEL_OK")
</pallas_src>

<mosaic_0001>
module attributes {stable_mosaic.version = 11 : i64} {
  func.func @_softplusb_kernel(%arg0: i32, %arg1: i32, %arg2: i32, %arg3: memref<32x32xf32, #tpu.memory_space<vmem>>, %arg4: memref<32x48xf32, #tpu.memory_space<vmem>>, %arg5: memref<1x48xf32, #tpu.memory_space<vmem>>, %arg6: memref<32x48xf32, #tpu.memory_space<vmem>>) attributes {dimension_semantics = [#tpu.dimension_semantics<parallel>, #tpu.dimension_semantics<parallel>, #tpu.dimension_semantics<arbitrary>], iteration_bounds = array<i64: 1, 1, 1>, scalar_prefetch = 0 : i64, scratch_operands = 0 : i64, tpu.core_type = #tpu.core_type<tc>, window_params = [{transform_indices = @transform_0, window_bounds = array<i64: 32, 32>}, {transform_indices = @transform_1, window_bounds = array<i64: 32, 48>}, {transform_indices = @transform_2, window_bounds = array<i64: 1, 48>}, {transform_indices = @transform_3, window_bounds = array<i64: 32, 48>}]} {
    %c0_i32 = arith.constant 0 : i32
    %0 = arith.cmpi eq, %arg2, %c0_i32 : i32
    %1 = arith.extui %0 : i1 to i32
    %c0_i32_0 = arith.constant 0 : i32
    %2 = arith.cmpi ne, %1, %c0_i32_0 : i32
    scf.if %2 {
      %cst_10 = arith.constant 0.000000e+00 : f32
      %12 = vector.broadcast %cst_10 : f32 to vector<32x48xf32>
      %c0_11 = arith.constant 0 : index
      %c0_12 = arith.constant 0 : index
      %13 = vector.load %arg6[%c0_11, %c0_12] : memref<32x48xf32, #tpu.memory_space<vmem>>, vector<32x48xf32>
      tpu.vector_store %arg6[%c0_11, %c0_12], %12 {strides = array<i32>} : memref<32x48xf32, #tpu.memory_space<vmem>>, vector<32x48xf32>,
    } else {
    }
    %c0 = arith.constant 0 : index
    %c0_1 = arith.constant 0 : index
    %3 = vector.load %arg6[%c0, %c0_1] : memref<32x48xf32, #tpu.memory_space<vmem>>, vector<32x48xf32>
    %c0_2 = arith.constant 0 : index
    %c0_3 = arith.constant 0 : index
    %4 = vector.load %arg3[%c0_2, %c0_3] : memref<32x32xf32, #tpu.memory_space<vmem>>, vector<32x32xf32>
    %c0_4 = arith.constant 0 : index
    %c0_5 = arith.constant 0 : index
    %5 = vector.load %arg4[%c0_4, %c0_5] : memref<32x48xf32, #tpu.memory_space<vmem>>, vector<32x48xf32>
    %cst = arith.constant dense<0.000000e+00> : vector<32x48xf32>
    %6 = tpu.matmul %4, %5, %cst {dimension_numbers = #tpu.dot_dimension_numbers<[1], [0], [0], [1], [0, 0, 1, 1], [], []>} : vector<32x32xf32>, vector<32x48xf32>, vector<32x48xf32> -> vector<32x48xf32>
    %7 = arith.addf %3, %6 : vector<32x48xf32>
    %c0_6 = arith.constant 0 : index
    %c0_7 = arith.constant 0 : index
    %8 = vector.load %arg6[%c0_6, %c0_7] : memref<32x48xf32, #tpu.memory_space<vmem>>, vector<32x48xf32>
    tpu.vector_store %arg6[%c0_6, %c0_7], %7 {strides = array<i32>} : memref<32x48xf32, #tpu.memory_space<vmem>>, vector<32x48xf32>,
    %c0_i32_8 = arith.constant 0 : i32
    %9 = arith.cmpi eq, %arg2, %c0_i32_8 : i32
    %10 = arith.extui %9 : i1 to i32
    %c0_i32_9 = arith.constant 0 : i32
    %11 = arith.cmpi ne, %10, %c0_i32_9 : i32
    scf.if %11 {
      %c0_10 = arith.constant 0 : index
      %c0_11 = arith.constant 0 : index
      %12 = vector.load %arg6[%c0_10, %c0_11] : memref<32x48xf32, #tpu.memory_space<vmem>>, vector<32x48xf32>
      %c0_12 = arith.constant 0 : index
      %c0_13 = arith.constant 0 : index
      %13 = vector.load %arg5[%c0_12, %c0_13] : memref<1x48xf32, #tpu.memory_space<vmem>>, vector<1x48xf32>
      %14 = vector.broadcast %13 : vector<1x48xf32> to vector<32x48xf32>
      %15 = arith.addf %12, %14 : vector<32x48xf32>
      %cst_14 = arith.constant 0.000000e+00 : f32
      %16 = vector.broadcast %cst_14 : f32 to vector<32x48xf32>
      %17 = arith.maximumf %15, %16 : vector<32x48xf32>
      %18 = math.absf %15 : vector<32x48xf32>
      %cst_15 = arith.constant 0.000000e+00 : f32
      %19 = vector.broadcast %cst_15 : f32 to vector<32x48xf32>
      %20 = arith.subf %19, %18 : vector<32x48xf32>
      %21 = math.exp %20 : vector<32x48xf32>
      %22 = math.log1p %21 : vector<32x48xf32>
      %23 = arith.addf %17, %22 : vector<32x48xf32>
      %c0_16 = arith.constant 0 : index
      %c0_17 = arith.constant 0 : index
      %24 = vector.load %arg6[%c0_16, %c0_17] : memref<32x48xf32, #tpu.memory_space<vmem>>, vector<32x48xf32>
      tpu.vector_store %arg6[%c0_16, %c0_17], %23 {strides = array<i32>} : memref<32x48xf32, #tpu.memory_space<vmem>>, vector<32x48xf32>,
    } else {
    }
    return
  }
  func.func @transform_0(%arg0: i32, %arg1: i32, %arg2: i32) -> (i32, i32) {
    %c0_i32 = arith.constant 0 : i32
    return %arg0, %arg2 : i32, i32
  }
  func.func @transform_1(%arg0: i32, %arg1: i32, %arg2: i32) -> (i32, i32) {
    %c0_i32 = arith.constant 0 : i32
    return %arg2, %arg1 : i32, i32
  }
  func.func @transform_2(%arg0: i32, %arg1: i32, %arg2: i32) -> (i32, i32) {
    %c0_i32 = arith.constant 0 : i32
    %c0_i32_0 = arith.constant 0 : i32
    return %c0_i32, %arg1 : i32, i32
  }
  func.func @transform_3(%arg0: i32, %arg1: i32, %arg2: i32) -> (i32, i32) {
    %c0_i32 = arith.constant 0 : i32
    return %arg0, %arg1 : i32, i32
  }
}

</mosaic_0001>

<llo_original>
// kernel: tpu_custom_call.1
$region0: #{tpu_custom_call.1}
  #allocation0 [shape = 'u32[]', space=smem, size = 0x4, offset = 0x4, fixed_abs, tag = 'smem constant byte address 0x4 - core index']
  #allocation1 [shape = 'u32[144,128]{1,0:T(1,128)}', space=vmem, size = 0x12000, scoped, tag = 'internal scratch']
  %s0 = inlined_call_operand.hbm [shape: f32[32,32], index: 0, kind: input, shape index: {}]
  %s1 = inlined_call_operand.hbm [shape: f32[32,48], index: 1, kind: input, shape index: {}]
  %s2 = inlined_call_operand.vmem [shape: f32[1,48], index: 2, kind: input, shape index: {}]
  %s3 = inlined_call_operand.hbm [shape: f32[32,48], index: 3, kind: output, shape index: {}]
  %s4 = sld [smem:[#allocation0]]
  $region38: #{tpu_custom_call.1} parent=0
    _
  %s6 = ssub.s32 1, %s4
  %s7 = scalar_select 0, %s6, %s4
  $region1: #{tpu_custom_call.1} parent=0
    #allocation2 [shape = 'u8[16384]{0}', space=vmem, size = 0x4000, scoped, tag = 'input window, operand 0, single buffered']
    #allocation3 [shape = 's32[1]{0}', space=sflag, size = 0x4, scoped, tag = 'scoped memory for tpu_custom_call.1']
    #allocation4 [shape = 's32[1]{0}', space=sflag, size = 0x4, scoped, tag = 'scoped memory for tpu_custom_call.1']
    #allocation5 [shape = 'u8[16384]{0}', space=vmem, size = 0x4000, scoped, tag = 'input window, operand 1, single buffered']
    #allocation6 [shape = 's32[1]{0}', space=sflag, size = 0x4, scoped, tag = 'scoped memory for tpu_custom_call.1']
    #allocation7 [shape = 'u8[16384]{0}', space=vmem, size = 0x4000, scoped, tag = 'output window, operand 0, single buffered']
    %8 = vsyncpa [#allocation3], 0
    %9 = vsyncpa [#allocation6], 0
    %10 = vsyncpa [#allocation4], 0
    // Predicated region
    $region2: #{tpu_custom_call.1} parent=1 // pred_check
      _
    $region3: #{tpu_custom_call.1} parent=1 // pred_check_branch
      %12 = sbr.rel (0) target = $region5
    $region4: #{tpu_custom_call.1} parent=1 // pred_region
      %s14 = ssub.s32 512, 512
      %15 = vsyncadd [#allocation3], %s14
      %s16 = sshll.u32 [#allocation2], 4
      %s17 = int_to_ptr.vmem [resolvable:$true] %s16
      %22 = dma.hbm_to_vmem [thread:$0]  %s0, 512, %s17, [#allocation3], 128, 128, 8
    $region5: #{tpu_custom_call.1} parent=1 // pred_fallthru
      _
    // Predicated region
    $region6: #{tpu_custom_call.1} parent=1 // pred_check
      _
    $region7: #{tpu_custom_call.1} parent=1 // pred_check_branch
      %24 = sbr.rel (0) target = $region9
    $region8: #{tpu_custom_call.1} parent=1 // pred_region
      %s26 = ssub.s32 512, 512
      %27 = vsyncadd [#allocation6], %s26
      %s28 = sshll.u32 [#allocation5], 4
      %s29 = int_to_ptr.vmem [resolvable:$true] %s28
      %34 = dma.hbm_to_vmem [thread:$0]  %s1, 512, %s29, [#allocation6], 128, 128, 8
    $region9: #{tpu_custom_call.1} parent=1 // pred_fallthru
      _
    // Predicated region
    $region10: #{tpu_custom_call.1} parent=1 // pred_check
      _
    $region11: #{tpu_custom_call.1} parent=1 // pred_check_branch
      %36 = sbr.rel (0) target = $region13
    $region12: #{tpu_custom_call.1} parent=1 // pred_region
      _
    $region13: #{tpu_custom_call.1} parent=1 // pred_fallthru
      _
    // Predicated region
    $region14: #{tpu_custom_call.1} parent=1 // pred_check
      _
    $region15: #{tpu_custom_call.1} parent=1 // pred_check_branch
      %38 = sbr.rel (0) target = $region17
    $region16: #{tpu_custom_call.1} parent=1 // pred_region
      %39 = dma.done [#allocation3], 512
    $region17: #{tpu_custom_call.1} parent=1 // pred_fallthru
      _
    // Predicated region
    $region18: #{tpu_custom_call.1} parent=1 // pred_check
      _
    $region19: #{tpu_custom_call.1} parent=1 // pred_check_branch
      %41 = sbr.rel (0) target = $region21
    $region20: #{tpu_custom_call.1} parent=1 // pred_region
      %42 = dma.done [#allocation6], 512
    $region21: #{tpu_custom_call.1} parent=1 // pred_fallthru
      _
    %p43 = scmp.eq.s32.totalorder 0, 0
    // Predicated region
    $region22: #{tpu_custom_call.1} parent=1 // pred_check
      %p44 = pneg %p43
    $region23: #{tpu_custom_call.1} parent=1 // pred_check_branch
      %46 = sbr.rel (%p44) target = $region25
    $region24: #{tpu_custom_call.1} parent=1 // pred_region
      %vm47 = vcmask 392192
      %48 = vst.msk [vmem:[#allocation7] sm:$0xff] %vm47, 0.0
      %49 = vst.msk [vmem:[#allocation7 + $0x8] sm:$0xff] %vm47, 0.0
      %50 = vst.msk [vmem:[#allocation7 + $0x10] sm:$0xff] %vm47, 0.0
      %51 = vst.msk [vmem:[#allocation7 + $0x18] sm:$0xff] %vm47, 0.0
    $region25: #{tpu_custom_call.1} parent=1 // pred_fallthru
      _
    %v52 = vld [vmem:[#allocation7] sm:$0xff]
    %v53 = vld [vmem:[#allocation7 + $0x8] sm:$0xff]
    %v54 = vld [vmem:[#allocation7 + $0x10] sm:$0xff]
    %v55 = vld [vmem:[#allocation7 + $0x18] sm:$0xff]
    %v56 = vld [vmem:[#allocation2] sm:$0xff]
    %v57 = vld [vmem:[#allocation2 + $0x8] sm:$0xff]
    %v58 = vld [vmem:[#allocation2 + $0x10] sm:$0xff]
    %v59 = vld [vmem:[#allocation2 + $0x18] sm:$0xff]
    %v60 = vld [vmem:[#allocation5] sm:$0xff]
    %v61 = vld [vmem:[#allocation5 + $0x8] sm:$0xff]
    %v62 = vld [vmem:[#allocation5 + $0x10] sm:$0xff]
    %v63 = vld [vmem:[#allocation5 + $0x18] sm:$0xff]
    %vm64 = vcmask 261120
    %v66 = vsel %vm64, %v56, 0
    %v69 = vsel %vm64, %v57, 0
    %v72 = vsel %vm64, %v58, 0
    %v75 = vsel %vm64, %v59, 0
    %77 = vmatprep.subr.mxu0 0.0
    %78 = vmatpush1.msra.mxu0 %v60
    %79 = vmatprep.subr.mxu0 0.0
    %80 = vmatpush1.msra.mxu0 %v61
    %81 = vmatprep.subr.mxu0 0.0
    %82 = vmatpush1.msra.mxu0 %v62
    %83 = vmatprep.subr.mxu0 0.0
    %84 = vmatpush1.msra.mxu0 %v63
    %85 = vmatprep.subr.mxu0 0.0
    %86 = vmatpush1.msra.mxu0 0.0
    %87 = vmatprep.subr.mxu0 0.0
    %88 = vmatpush1.msra.mxu0 0.0
    %89 = vmatprep.subr.mxu0 0.0
    %90 = vmatpush1.msra.mxu0 0.0
    %91 = vmatprep.subr.mxu0 0.0
    %92 = vmatpush1.msra.mxu0 0.0
    %93 = vmatprep.subr.mxu0 0.0
    %94 = vmatpush1.msra.mxu0 0.0
    %95 = vmatprep.subr.mxu0 0.0
    %96 = vmatpush1.msra.mxu0 0.0
    %97 = vmatprep.subr.mxu0 0.0
    %98 = vmatpush1.msra.mxu0 0.0
    %99 = vmatprep.subr.mxu0 0.0
    %100 = vmatpush1.msra.mxu0 0.0
    %101 = vmatprep.subr.mxu0 0.0
    %102 = vmatpush1.msra.mxu0 0.0
    %103 = vmatprep.subr.mxu0 0.0
    %104 = vmatpush1.msra.mxu0 0.0
    %105 = vmatprep.subr.mxu0 0.0
    %106 = vmatpush1.msra.mxu0 0.0
    %107 = vmatprep.subr.mxu0 0.0
    %108 = vmatpush1.msra.mxu0 0.0
    %109 = vmatprep.subr.mxu0 0.0
    %110 = vmatpush1.msra.mxu0 0.0
    %111 = vmatprep.subr.mxu0 0.0
    %112 = vmatpush1.msra.mxu0 0.0
    %113 = vmatprep.subr.mxu0 0.0
    %114 = vmatpush1.msra.mxu0 0.0
    %115 = vmatprep.subr.mxu0 0.0
    %116 = vmatpush1.msra.mxu0 0.0
    %117 = vmatprep.subr.mxu0 0.0
    %118 = vmatpush1.msra.mxu0 0.0
    %119 = vmatprep.subr.mxu0 0.0
    %120 = vmatpush1.msra.mxu0 0.0
    %121 = vmatprep.subr.mxu0 0.0
    %122 = vmatpush1.msra.mxu0 0.0
    %123 = vmatprep.subr.mxu0 0.0
    %124 = vmatpush1.msra.mxu0 0.0
    %125 = vmatprep.subr.mxu0 0.0
    %126 = vmatpush1.msra.mxu0 0.0
    %127 = vmatprep.subr.mxu0 0.0
    %128 = vmatpush1.msra.mxu0 0.0
    %129 = vmatprep.subr.mxu0 0.0
    %130 = vmatpush1.msra.mxu0 0.0
    %131 = vmatprep.subr.mxu0 0.0
    %132 = vmatpush1.msra.mxu0 0.0
    %133 = vmatprep.subr.mxu0 0.0
    %134 = vmatpush1.msra.mxu0 0.0
    %135 = vmatprep.subr.mxu0 0.0
    %136 = vmatpush1.msra.mxu0 0.0
    %137 = vmatprep.subr.mxu0 0.0
    %138 = vmatpush1.msra.mxu0 0.0
    %139 = vmatprep.subr.mxu0 0.0
    %140 = vmatpush1.msra.mxu0 0.0
    %141 = vmatprep.mubr.f32.mxu0 0.0
    %142 = vmatmul.mubr.f32.gmra.mrb[0].mxu0 %v66
    %v143 = vpop.f32.mrb[0].mxu0
    %v144 = vadd.f32 0.0, %v143
    %v145 = vpop.f32.mrb[0].mxu0
    %146 = vmatprep.mubr.f32.mxu0 0.0
    %147 = vmatmul.mubr.f32.gmra.mrb[0].mxu0 %v69
    %v148 = vpop.f32.mrb[0].mxu0
    %v149 = vadd.f32 0.0, %v148
    %v150 = vpop.f32.mrb[0].mxu0
    %151 = vmatprep.mubr.f32.mxu0 0.0
    %152 = vmatmul.mubr.f32.gmra.mrb[0].mxu0 %v72
    %v153 = vpop.f32.mrb[0].mxu0
    %v154 = vadd.f32 0.0, %v153
    %v155 = vpop.f32.mrb[0].mxu0
    %156 = vmatprep.mubr.f32.mxu0 0.0
    %157 = vmatmul.mubr.f32.gmra.mrb[0].mxu0 %v75
    %v158 = vpop.f32.mrb[0].mxu0
    %v159 = vadd.f32 0.0, %v158
    %v160 = vpop.f32.mrb[0].mxu0
    %161 = vdwg.mxu0
    %v162 = vadd.f32 %v52, %v144
    %v163 = vadd.f32 %v53, %v149
    %v164 = vadd.f32 %v54, %v154
    %v165 = vadd.f32 %v55, %v159
    %vm166 = vcmask 392192
    %167 = vst.msk [vmem:[#allocation7] sm:$0xff] %vm166, %v162
    %168 = vst.msk [vmem:[#allocation7 + $0x8] sm:$0xff] %vm166, %v163
    %169 = vst.msk [vmem:[#allocation7 + $0x10] sm:$0xff] %vm166, %v164
    %170 = vst.msk [vmem:[#allocation7 + $0x18] sm:$0xff] %vm166, %v165
    // Predicated region
    $region26: #{tpu_custom_call.1} parent=1 // pred_check
      %p171 = pneg %p43
    $region27: #{tpu_custom_call.1} parent=1 // pred_check_branch
      %173 = sbr.rel (%p171) target = $region29
    $region28: #{tpu_custom_call.1} parent=1 // pred_region
      %v174 = vld [vmem:[#allocation7] sm:$0xff]
      %v175 = vld [vmem:[#allocation7 + $0x8] sm:$0xff]
      %v176 = vld [vmem:[#allocation7 + $0x10] sm:$0xff]
      %v177 = vld [vmem:[#allocation7 + $0x18] sm:$0xff]
      %v178 = vld [vmem:[%s2] sm:$0x1]
      %v180 = vlaneseq
      %v181 = vshrl.u32 %v180, 7
      %v182 = vsub.s32 0, %v181
      %v183 = vrot.slane %v178, %v182
      %v185 = vadd.f32 %v174, %v183
      %v186 = vadd.f32 %v175, %v183
      %v187 = vadd.f32 %v176, %v183
      %v188 = vadd.f32 %v177, %v183
      %v189 = vmax.f32 %v185, 0.0
      %v190 = vmax.f32 %v186, 0.0
      %v191 = vmax.f32 %v187, 0.0
      %v192 = vmax.f32 %v188, 0.0
      %v193 = vand.u32 2147483647, %v185
      %v194 = vand.u32 2147483647, %v186
      %v195 = vand.u32 2147483647, %v187
      %v196 = vand.u32 2147483647, %v188
      %v197 = vsub.f32 0.0, %v193
      %v198 = vsub.f32 0.0, %v194
      %v199 = vsub.f32 0.0, %v195
      %v200 = vsub.f32 0.0, %v196
      %v201 = vmul.f32 %v197, 1.442695
      %v202 = vpow.pop %v201
      %v203 = vmul.f32 %v198, 1.442695
      %v204 = vpow.pop %v203
      %v205 = vmul.f32 %v199, 1.442695
      %v206 = vpow.pop %v205
      %v207 = vmul.f32 %v200, 1.442695
      %v208 = vpow.pop %v207
      %v209 = vadd.f32 %v202, 1.0
      %v210 = vlog2.pop %v209
      %v211 = vmul.f32 %v210, 0.6931472
      %v212 = vmul.f32 -0.5, %v202
      %v213 = vadd.f32 %v212, 1.0
      %v214 = vmul.f32 %v213, %v202
      %v215 = vand.u32 2147483647, %v202
      %vm216 = vcmp.lt.f32.partialorder %v215, 0.0004427343
      %v217 = vsel %vm216, %v214, %v211
      %v218 = vadd.f32 %v204, 1.0
      %v219 = vlog2.pop %v218
      %v220 = vmul.f32 %v219, 0.6931472
      %v221 = vmul.f32 -0.5, %v204
      %v222 = vadd.f32 %v221, 1.0
      %v223 = vmul.f32 %v222, %v204
      %v224 = vand.u32 2147483647, %v204
      %vm225 = vcmp.lt.f32.partialorder %v224, 0.0004427343
      %v226 = vsel %vm225, %v223, %v220
      %v227 = vadd.f32 %v206, 1.0
      %v228 = vlog2.pop %v227
      %v229 = vmul.f32 %v228, 0.6931472
      %v230 = vmul.f32 -0.5, %v206
      %v231 = vadd.f32 %v230, 1.0
      %v232 = vmul.f32 %v231, %v206
      %v233 = vand.u32 2147483647, %v206
      %vm234 = vcmp.lt.f32.partialorder %v233, 0.0004427343
      %v235 = vsel %vm234, %v232, %v229
      %v236 = vadd.f32 %v208, 1.0
      %v237 = vlog2.pop %v236
      %v238 = vmul.f32 %v237, 0.6931472
      %v239 = vmul.f32 -0.5, %v208
      %v240 = vadd.f32 %v239, 1.0
      %v241 = vmul.f32 %v240, %v208
      %v242 = vand.u32 2147483647, %v208
      %vm243 = vcmp.lt.f32.partialorder %v242, 0.0004427343
      %v244 = vsel %vm243, %v241, %v238
      %v245 = vadd.f32 %v189, %v217
      %v246 = vadd.f32 %v190, %v226
      %v247 = vadd.f32 %v191, %v235
      %v248 = vadd.f32 %v192, %v244
      %249 = vst.msk [vmem:[#allocation7] sm:$0xff] %vm166, %v245
      %250 = vst.msk [vmem:[#allocation7 + $0x8] sm:$0xff] %vm166, %v246
      %251 = vst.msk [vmem:[#allocation7 + $0x10] sm:$0xff] %vm166, %v247
      %252 = vst.msk [vmem:[#allocation7 + $0x18] sm:$0xff] %vm166, %v248
    $region29: #{tpu_custom_call.1} parent=1 // pred_fallthru
      _
    // Predicated region
    $region30: #{tpu_custom_call.1} parent=1 // pred_check
      _
    $region31: #{tpu_custom_call.1} parent=1 // pred_check_branch
      %254 = sbr.rel (0) target = $region33
    $region32: #{tpu_custom_call.1} parent=1 // pred_region
      %s256 = ssub.s32 512, 512
      %257 = vsyncadd [#allocation4], %s256
      %s258 = sshll.u32 [#allocation7], 4
      %s259 = int_to_ptr.vmem [resolvable:$true] %s258
      %264 = dma.vmem_to_hbm [thread:$0]  %s259, 512, %s3, [#allocation4], 128, 128, 8
    $region33: #{tpu_custom_call.1} parent=1 // pred_fallthru
      _
    // Predicated region
    $region34: #{tpu_custom_call.1} parent=1 // pred_check
      _
    $region35: #{tpu_custom_call.1} parent=1 // pred_check_branch
      %266 = sbr.rel (0) target = $region37
    $region36: #{tpu_custom_call.1} parent=1 // pred_region
      %267 = dma.done [#allocation4], 512
    $region37: #{tpu_custom_call.1} parent=1 // pred_fallthru
      _
    %268 = vsyncpa [#allocation3], 1
    %269 = vsyncpa [#allocation6], 1
    %270 = vsyncpa [#allocation4], 1

</llo_original>
